<compile_context>
chip_gen: v7x
topology: tpu7x:2x2x1
jax: 0.10.0
libtpu: 0.0.40
codegen_flags: <defaults>
</compile_context>

<pallas_src>
import functools

import jax
import jax.numpy as jnp
from jax import lax
from jax.experimental import pallas as pl
from jax.experimental.pallas import tpu as pltpu

EPS = 1e-5  # nn.LayerNorm default


def _round_up(x, m):
    return (x + m - 1) // m * m


def _cdiv(a, b):
    return -(-a // b)


def _masked_layernorm(x, w, b, n_valid, mask):
    """PyTorch-style LayerNorm over a zero-padded last dim (f32).

    Precondition: x[..., n_valid:] == 0 and w/b are zero beyond n_valid, so the
    padded columns of the result stay exactly zero.
    """
    inv_n = 1.0 / float(n_valid)
    mu = jnp.sum(x, axis=-1, keepdims=True) * inv_n
    xc = jnp.where(mask, x - mu, 0.0)
    var = jnp.sum(xc * xc, axis=-1, keepdims=True) * inv_n
    return xc * lax.rsqrt(var + EPS) * w + b


def _selective_attention_kernel(
    v_ref, q_ref,
    wsel_ref, bsel_ref,            # select_linear (pre-transposed, padded)
    ln1_w_ref, ln1_b_ref,          # SelectiveAttention.ln (over in_dim)
    wfg_ref, bfg_ref,              # fused filter_linear | forward_linear
    ln2_w_ref, ln2_b_ref,          # FilteredLinear.ln (over out_dim)
    out_ref,
    *, bt, lq_p, in_dim, out_dim, dout_p,
):
    q = q_ref[...]                 # (bt*lq_p, Din_p)  lane-dense slab, mm dtype
    v = v_ref[...]                 # (bt, Lv_p, Din_p) mm dtype
    mm_dtype = q.dtype
    din_p = q.shape[-1]

    # LN column-validity masks, built once per kernel invocation (hoisted).
    mask_in = lax.broadcasted_iota(jnp.int32, (1, din_p), 1) < in_dim
    mask_out = lax.broadcasted_iota(jnp.int32, (1, dout_p), 1) < out_dim

    # attn = select_linear(q): one big MXU matmul over all bt*lq_p rows (f32 acc).
    attn = jnp.dot(q, wsel_ref[...], preferred_element_type=jnp.float32) + bsel_ref[...]

    # q = torch.bmm(attn, v): batched matmul on the MXU (f32 acc).
    attn3 = attn.astype(mm_dtype).reshape(bt, lq_p, attn.shape[-1])
    h = jnp.einsum("blk,bkd->bld", attn3, v, preferred_element_type=jnp.float32)
    h = h.reshape(bt * lq_p, din_p)

    # LayerNorm over in_dim (f32, padded columns masked out of the statistics).
    h = _masked_layernorm(h, ln1_w_ref[...], ln1_b_ref[...], in_dim, mask_in)

    # FilteredLinear: fused (Din_p, 2*Dout_p) matmul, ReLU, gated product.
    fg = jnp.maximum(
        jnp.dot(h.astype(mm_dtype), wfg_ref[...], preferred_element_type=jnp.float32)
        + bfg_ref[...], 0.0)
    y = fg[:, :dout_p] * fg[:, dout_p:]

    # LayerNorm over out_dim (f32).
    y = _masked_layernorm(y, ln2_w_ref[...], ln2_b_ref[...], out_dim, mask_out)

    out_ref[...] = y.astype(out_ref.dtype)


def prepare_params(params, *, matmul_dtype=jnp.bfloat16):
    """Pad, fuse and cast module parameters ONCE (hoisted out of the fwd path)."""
    f32 = jnp.float32
    in_dim, lv = params["wsel"].shape
    out_dim = params["wf"].shape[1]
    din_p = _round_up(in_dim, 128)
    dout_p = _round_up(out_dim, 128)
    lv_p = _round_up(lv, 128)

    def pad2(x, r, c):
        x = jnp.asarray(x, f32)
        return jnp.pad(x, ((0, r - x.shape[0]), (0, c - x.shape[1])))

    # Fuse filter_linear | forward_linear into one wide matmul.
    wfg = jnp.concatenate(
        [pad2(params["wf"], din_p, dout_p), pad2(params["wg"], din_p, dout_p)], axis=1)
    bfg = jnp.concatenate(
        [pad2(params["bf"], 1, dout_p), pad2(params["bg"], 1, dout_p)], axis=1)

    return {
        # Matmul operands: cast AFTER zero-padding so padded columns stay exactly 0.
        "wsel": pad2(params["wsel"], din_p, lv_p).astype(matmul_dtype),
        "wfg": wfg.astype(matmul_dtype),
        # Biases / LN params stay f32 (accumulation and LayerNorm are f32).
        "bsel": pad2(params["bsel"], 1, lv_p),
        "bfg": bfg,
        "ln1_w": pad2(params["ln1_w"], 1, din_p),
        "ln1_b": pad2(params["ln1_b"], 1, din_p),
        "ln2_w": pad2(params["ln2_w"], 1, dout_p),
        "ln2_b": pad2(params["ln2_b"], 1, dout_p),
    }


def selective_attention(v, q, prep, *, out_dim, mxu_rows=256):
    B, lv, in_dim = v.shape
    _, Lq, _ = q.shape
    f32 = jnp.float32
    mm_dtype = prep["wsel"].dtype

    din_p, lv_p = prep["wsel"].shape
    dout_p = prep["ln2_w"].shape[1]
    lq_p = _round_up(Lq, 8)

    # Batch tile: fill the MXU's M dimension (target 256 rows on v6e/v7x, still a
    # multiple of 128 for v5e); prefer >=2 grid steps when that keeps >=128 rows
    # (v7x megacore shards the "parallel" grid axis across its 2 TensorCores).
    bt = max(1, min(_cdiv(mxu_rows, lq_p), B))
    if _cdiv(B, bt) < 2 and B >= 2 and _cdiv(B, 2) * lq_p >= 128:
        bt = _cdiv(B, 2)
    nb = _cdiv(B, bt)
    b_p = nb * bt
    m_tile = bt * lq_p

    # Pad activations (only the dims that need it); cast AFTER padding.
    v_p = jnp.pad(v, ((0, b_p - B), (0, lv_p - lv), (0, din_p - in_dim))).astype(mm_dtype)
    q_p = jnp.pad(q, ((0, b_p - B), (0, lq_p - Lq), (0, din_p - in_dim)))
    q_flat = q_p.reshape(b_p * lq_p, din_p).astype(mm_dtype)

    # VMEM budget: resident weights x1 + double-buffered v/q/out + f32 intermediates.
    it_mm = jnp.dtype(mm_dtype).itemsize
    weight_bytes = sum(int(a.size) * a.dtype.itemsize for a in prep.values())
    stream_bytes = 2 * (bt * lv_p * din_p * it_mm
                        + m_tile * din_p * it_mm
                        + m_tile * dout_p * 4)
    interm_bytes = 4 * m_tile * (lv_p + 2 * din_p + 3 * dout_p)
    vmem_bytes = int(1.5 * (weight_bytes + stream_bytes + interm_bytes))
    vmem_bytes = min(max(vmem_bytes, 32 * 1024 * 1024), 64 * 1024 * 1024)

    kernel = functools.partial(
        _selective_attention_kernel,
        bt=bt, lq_p=lq_p, in_dim=in_dim, out_dim=out_dim, dout_p=dout_p)

    # Constant weights: whole-array, grid-resident VMEM refs (single-buffered).
    weight_spec = pl.BlockSpec(memory_space=pltpu.MemorySpace.VMEM)

    out_flat = pl.pallas_call(
        kernel,
        out_shape=jax.ShapeDtypeStruct((b_p * lq_p, dout_p), f32),
        grid_spec=pltpu.PrefetchScalarGridSpec(
            num_scalar_prefetch=0,
            grid=(nb,),
            in_specs=[
                pl.BlockSpec((bt, lv_p, din_p), lambda g: (g, 0, 0)),   # v
                pl.BlockSpec((m_tile, din_p), lambda g: (g, 0)),        # q (flattened)
                weight_spec,   # wsel
                weight_spec,   # bsel
                weight_spec,   # ln1 weight
                weight_spec,   # ln1 bias
                weight_spec,   # wf|wg fused
                weight_spec,   # bf|bg fused
                weight_spec,   # ln2 weight
                weight_spec,   # ln2 bias
            ],
            out_specs=pl.BlockSpec((m_tile, dout_p), lambda g: (g, 0)),
        ),
        compiler_params=pltpu.CompilerParams(
            dimension_semantics=("parallel",),
            vmem_limit_bytes=vmem_bytes,
        ),
    )(v_p, q_flat, prep["wsel"], prep["bsel"], prep["ln1_w"], prep["ln1_b"],
      prep["wfg"], prep["bfg"], prep["ln2_w"], prep["ln2_b"])

    out = out_flat.reshape(b_p, lq_p, dout_p)
    return out[:B, :Lq, :out_dim]


# ------------------------- pure-JAX reference ------------------------------

def _layernorm_ref(x, w, b):
    mu = jnp.mean(x, axis=-1, keepdims=True)
    var = jnp.mean((x - mu) ** 2, axis=-1, keepdims=True)
    return (x - mu) * lax.rsqrt(var + EPS) * w + b


def reference_forward(v, q, p):
    attn = q @ p["wsel"] + p["bsel"]
    h = jnp.einsum("blk,bkd->bld", attn, v)
    h = _layernorm_ref(h, p["ln1_w"], p["ln1_b"])
    f = jnp.maximum(h @ p["wf"] + p["bf"], 0.0)
    g = jnp.maximum(h @ p["wg"] + p["bg"], 0.0)
    return _layernorm_ref(f * g, p["ln2_w"], p["ln2_b"])


def init_params(key, lv, in_dim, out_dim):
    ks = jax.random.split(key, 6)
    scale_in = 1.0 / jnp.sqrt(in_dim)
    # Linear weights stored pre-transposed: (in_features, out_features).
    return {
        "wsel": jax.random.uniform(ks[0], (in_dim, lv), jnp.float32, -scale_in, scale_in),
        "bsel": jax.random.uniform(ks[1], (1, lv), jnp.float32, -scale_in, scale_in),
        "ln1_w": jnp.ones((1, in_dim), jnp.float32),
        "ln1_b": jnp.zeros((1, in_dim), jnp.float32),
        "wf": jax.random.uniform(ks[2], (in_dim, out_dim), jnp.float32, -scale_in, scale_in),
        "bf": jax.random.uniform(ks[3], (1, out_dim), jnp.float32, -scale_in, scale_in),
        "wg": jax.random.uniform(ks[4], (in_dim, out_dim), jnp.float32, -scale_in, scale_in),
        "bg": jax.random.uniform(ks[5], (1, out_dim), jnp.float32, -scale_in, scale_in),
        "ln2_w": jnp.ones((1, out_dim), jnp.float32),
        "ln2_b": jnp.zeros((1, out_dim), jnp.float32),
    }
    # NOTE: select_sigmoid is declared in the PyTorch module but never used in
    # forward(), so it is intentionally omitted.


if __name__ == "__main__":
    B, lv, Lq, in_dim, out_dim = 2, 8, 8, 32, 32

    key = jax.random.PRNGKey(0)
    kv, kq, kp = jax.random.split(key, 3)
    v = jax.random.normal(kv, (B, lv, in_dim), jnp.float32)
    q = jax.random.normal(kq, (B, Lq, in_dim), jnp.float32)
    params = init_params(kp, lv, in_dim, out_dim)

    ref = reference_forward(v, q, params)

    fwd = jax.jit(functools.partial(selective_attention, out_dim=out_dim))

    # Exactness check: f32 matmul path must match the f32 reference tightly.
    prep_f32 = prepare_params(params, matmul_dtype=jnp.float32)
    out_f32 = jax.block_until_ready(fwd(v, q, prep_f32))
    assert out_f32.shape == (B, Lq, out_dim)
    assert jnp.allclose(out_f32, ref, atol=1e-4, rtol=1e-4), "f32 path mismatch vs reference"

    # Performance path: bf16 matmul inputs, f32 accumulation + f32 LayerNorms.
    prep_bf16 = prepare_params(params, matmul_dtype=jnp.bfloat16)
    out_bf16 = jax.block_until_ready(fwd(v, q, prep_bf16))
    assert out_bf16.shape == (B, Lq, out_dim)
    assert jnp.allclose(out_bf16, ref, atol=5e-2, rtol=5e-2), "bf16 path mismatch vs reference"

    print("KERNEL_OK")
</pallas_src>

<mosaic_0001>
module attributes {stable_mosaic.version = 11 : i64} {
  func.func @_selective_attention_kernel(%arg0: i32, %arg1: memref<2x128x128xf32, #tpu.memory_space<vmem>>, %arg2: memref<16x128xf32, #tpu.memory_space<vmem>>, %arg3: memref<128x128xf32, #tpu.memory_space<vmem>>, %arg4: memref<1x128xf32, #tpu.memory_space<vmem>>, %arg5: memref<1x128xf32, #tpu.memory_space<vmem>>, %arg6: memref<1x128xf32, #tpu.memory_space<vmem>>, %arg7: memref<128x256xf32, #tpu.memory_space<vmem>>, %arg8: memref<1x256xf32, #tpu.memory_space<vmem>>, %arg9: memref<1x128xf32, #tpu.memory_space<vmem>>, %arg10: memref<1x128xf32, #tpu.memory_space<vmem>>, %arg11: memref<16x128xf32, #tpu.memory_space<vmem>>) attributes {dimension_semantics = [#tpu.dimension_semantics<parallel>], iteration_bounds = array<i64: 1>, scalar_prefetch = 0 : i64, scratch_operands = 0 : i64, tpu.core_type = #tpu.core_type<tc>, window_params = [{transform_indices = @transform_0, window_bounds = array<i64: 2, 128, 128>}, {transform_indices = @transform_1, window_bounds = array<i64: 16, 128>}, {pipeline_mode = #tpu.pipeline_mode<synchronous>, transform_indices = @transform_2, window_bounds = array<i64: 128, 128>}, {pipeline_mode = #tpu.pipeline_mode<synchronous>, transform_indices = @transform_3, window_bounds = array<i64: 1, 128>}, {pipeline_mode = #tpu.pipeline_mode<synchronous>, transform_indices = @transform_4, window_bounds = array<i64: 1, 128>}, {pipeline_mode = #tpu.pipeline_mode<synchronous>, transform_indices = @transform_5, window_bounds = array<i64: 1, 128>}, {pipeline_mode = #tpu.pipeline_mode<synchronous>, transform_indices = @transform_6, window_bounds = array<i64: 128, 256>}, {pipeline_mode = #tpu.pipeline_mode<synchronous>, transform_indices = @transform_7, window_bounds = array<i64: 1, 256>}, {pipeline_mode = #tpu.pipeline_mode<synchronous>, transform_indices = @transform_8, window_bounds = array<i64: 1, 128>}, {pipeline_mode = #tpu.pipeline_mode<synchronous>, transform_indices = @transform_9, window_bounds = array<i64: 1, 128>}, {transform_indices = @transform_10, window_bounds = array<i64: 16, 128>}]} {
    %c0 = arith.constant 0 : index
    %c0_0 = arith.constant 0 : index
    %0 = vector.load %arg2[%c0, %c0_0] : memref<16x128xf32, #tpu.memory_space<vmem>>, vector<16x128xf32>
    %c0_1 = arith.constant 0 : index
    %c0_2 = arith.constant 0 : index
    %c0_3 = arith.constant 0 : index
    %1 = vector.load %arg1[%c0_1, %c0_2, %c0_3] : memref<2x128x128xf32, #tpu.memory_space<vmem>>, vector<2x128x128xf32>
    %2 = tpu.iota {dimensions = array<i32: 1>} : vector<1x128xi32>
    %c32_i32 = arith.constant 32 : i32
    %3 = vector.broadcast %c32_i32 : i32 to vector<1x128xi32>
    %4 = arith.cmpi slt, %2, %3 : vector<1x128xi32>
    %5 = tpu.iota {dimensions = array<i32: 1>} : vector<1x128xi32>
    %c32_i32_4 = arith.constant 32 : i32
    %6 = vector.broadcast %c32_i32_4 : i32 to vector<1x128xi32>
    %7 = arith.cmpi slt, %5, %6 : vector<1x128xi32>
    %c0_5 = arith.constant 0 : index
    %c0_6 = arith.constant 0 : index
    %8 = vector.load %arg3[%c0_5, %c0_6] : memref<128x128xf32, #tpu.memory_space<vmem>>, vector<128x128xf32>
    %cst = arith.constant dense<0.000000e+00> : vector<16x128xf32>
    %9 = tpu.matmul %0, %8, %cst {dimension_numbers = #tpu.dot_dimension_numbers<[1], [0], [0], [1], [0, 0, 1, 1], [], []>} : vector<16x128xf32>, vector<128x128xf32>, vector<16x128xf32> -> vector<16x128xf32>
    %c0_7 = arith.constant 0 : index
    %c0_8 = arith.constant 0 : index
    %10 = vector.load %arg4[%c0_7, %c0_8] : memref<1x128xf32, #tpu.memory_space<vmem>>, vector<1x128xf32>
    %11 = vector.broadcast %10 : vector<1x128xf32> to vector<16x128xf32>
    %12 = arith.addf %9, %11 : vector<16x128xf32>
    %13 = vector.shape_cast %12 : vector<16x128xf32> to vector<2x8x128xf32>
    "tpu.trace_start"() <{level = 10 : i32, message = "blk,bkd->bld"}> : () -> ()
    %cst_9 = arith.constant dense<0.000000e+00> : vector<2x8x128xf32>
    %14 = tpu.matmul %13, %1, %cst_9 {dimension_numbers = #tpu.dot_dimension_numbers<[2], [1], [1], [2], [0, 0, 0, 1, 1, 2], [0], [0]>} : vector<2x8x128xf32>, vector<2x128x128xf32>, vector<2x8x128xf32> -> vector<2x8x128xf32>
    "tpu.trace_stop"() : () -> ()
    %15 = vector.shape_cast %14 : vector<2x8x128xf32> to vector<16x128xf32>
    %c0_10 = arith.constant 0 : index
    %c0_11 = arith.constant 0 : index
    %16 = vector.load %arg5[%c0_10, %c0_11] : memref<1x128xf32, #tpu.memory_space<vmem>>, vector<1x128xf32>
    %c0_12 = arith.constant 0 : index
    %c0_13 = arith.constant 0 : index
    %17 = vector.load %arg6[%c0_12, %c0_13] : memref<1x128xf32, #tpu.memory_space<vmem>>, vector<1x128xf32>
    %cst_14 = arith.constant dense<0.000000e+00> : vector<16xf32>
    %18 = vector.multi_reduction <add>, %15, %cst_14 [1] : vector<16x128xf32> to vector<16xf32>
    %19 = vector.shape_cast %18 : vector<16xf32> to vector<16x1xf32>
    %cst_15 = arith.constant 3.125000e-02 : f32
    %20 = vector.broadcast %cst_15 : f32 to vector<16x1xf32>
    %21 = arith.mulf %19, %20 : vector<16x1xf32>
    %22 = vector.broadcast %21 : vector<16x1xf32> to vector<16x128xf32>
    %23 = arith.subf %15, %22 : vector<16x128xf32>
    %cst_16 = arith.constant 0.000000e+00 : f32
    %24 = vector.shape_cast %4 : vector<1x128xi1> to vector<1x128xi1>
    %25 = vector.broadcast %24 : vector<1x128xi1> to vector<16x128xi1>
    %26 = vector.broadcast %cst_16 : f32 to vector<16x128xf32>
    %27 = arith.select %25, %23, %26 : vector<16x128xi1>, vector<16x128xf32>
    %28 = arith.mulf %27, %27 : vector<16x128xf32>
    %cst_17 = arith.constant dense<0.000000e+00> : vector<16xf32>
    %29 = vector.multi_reduction <add>, %28, %cst_17 [1] : vector<16x128xf32> to vector<16xf32>
    %30 = vector.shape_cast %29 : vector<16xf32> to vector<16x1xf32>
    %cst_18 = arith.constant 3.125000e-02 : f32
    %31 = vector.broadcast %cst_18 : f32 to vector<16x1xf32>
    %32 = arith.mulf %30, %31 : vector<16x1xf32>
    %cst_19 = arith.constant 9.99999974E-6 : f32
    %33 = vector.broadcast %cst_19 : f32 to vector<16x1xf32>
    %34 = arith.addf %32, %33 : vector<16x1xf32>
    %35 = math.rsqrt %34 : vector<16x1xf32>
    %36 = vector.broadcast %35 : vector<16x1xf32> to vector<16x128xf32>
    %37 = arith.mulf %27, %36 : vector<16x128xf32>
    %38 = vector.broadcast %16 : vector<1x128xf32> to vector<16x128xf32>
    %39 = arith.mulf %37, %38 : vector<16x128xf32>
    %40 = vector.broadcast %17 : vector<1x128xf32> to vector<16x128xf32>
    %41 = arith.addf %39, %40 : vector<16x128xf32>
    %c0_20 = arith.constant 0 : index
    %c0_21 = arith.constant 0 : index
    %42 = vector.load %arg7[%c0_20, %c0_21] : memref<128x256xf32, #tpu.memory_space<vmem>>, vector<128x256xf32>
    %cst_22 = arith.constant dense<0.000000e+00> : vector<16x256xf32>
    %43 = tpu.matmul %41, %42, %cst_22 {dimension_numbers = #tpu.dot_dimension_numbers<[1], [0], [0], [1], [0, 0, 1, 1], [], []>} : vector<16x128xf32>, vector<128x256xf32>, vector<16x256xf32> -> vector<16x256xf32>
    %c0_23 = arith.constant 0 : index
    %c0_24 = arith.constant 0 : index
    %44 = vector.load %arg8[%c0_23, %c0_24] : memref<1x256xf32, #tpu.memory_space<vmem>>, vector<1x256xf32>
    %45 = vector.broadcast %44 : vector<1x256xf32> to vector<16x256xf32>
    %46 = arith.addf %43, %45 : vector<16x256xf32>
    %cst_25 = arith.constant 0.000000e+00 : f32
    %47 = vector.broadcast %cst_25 : f32 to vector<16x256xf32>
    %48 = arith.maximumf %46, %47 : vector<16x256xf32>
    %49 = vector.extract_strided_slice %48 {offsets = [0, 0], sizes = [16, 128], strides = [1, 1]} : vector<16x256xf32> to vector<16x128xf32>
    %50 = vector.extract_strided_slice %48 {offsets = [0, 128], sizes = [16, 128], strides = [1, 1]} : vector<16x256xf32> to vector<16x128xf32>
    %51 = arith.mulf %49, %50 : vector<16x128xf32>
    %c0_26 = arith.constant 0 : index
    %c0_27 = arith.constant 0 : index
    %52 = vector.load %arg9[%c0_26, %c0_27] : memref<1x128xf32, #tpu.memory_space<vmem>>, vector<1x128xf32>
    %c0_28 = arith.constant 0 : index
    %c0_29 = arith.constant 0 : index
    %53 = vector.load %arg10[%c0_28, %c0_29] : memref<1x128xf32, #tpu.memory_space<vmem>>, vector<1x128xf32>
    %cst_30 = arith.constant dense<0.000000e+00> : vector<16xf32>
    %54 = vector.multi_reduction <add>, %51, %cst_30 [1] : vector<16x128xf32> to vector<16xf32>
    %55 = vector.shape_cast %54 : vector<16xf32> to vector<16x1xf32>
    %cst_31 = arith.constant 3.125000e-02 : f32
    %56 = vector.broadcast %cst_31 : f32 to vector<16x1xf32>
    %57 = arith.mulf %55, %56 : vector<16x1xf32>
    %58 = vector.broadcast %57 : vector<16x1xf32> to vector<16x128xf32>
    %59 = arith.subf %51, %58 : vector<16x128xf32>
    %cst_32 = arith.constant 0.000000e+00 : f32
    %60 = vector.shape_cast %7 : vector<1x128xi1> to vector<1x128xi1>
    %61 = vector.broadcast %60 : vector<1x128xi1> to vector<16x128xi1>
    %62 = vector.broadcast %cst_32 : f32 to vector<16x128xf32>
    %63 = arith.select %61, %59, %62 : vector<16x128xi1>, vector<16x128xf32>
    %64 = arith.mulf %63, %63 : vector<16x128xf32>
    %cst_33 = arith.constant dense<0.000000e+00> : vector<16xf32>
    %65 = vector.multi_reduction <add>, %64, %cst_33 [1] : vector<16x128xf32> to vector<16xf32>
    %66 = vector.shape_cast %65 : vector<16xf32> to vector<16x1xf32>
    %cst_34 = arith.constant 3.125000e-02 : f32
    %67 = vector.broadcast %cst_34 : f32 to vector<16x1xf32>
    %68 = arith.mulf %66, %67 : vector<16x1xf32>
    %cst_35 = arith.constant 9.99999974E-6 : f32
    %69 = vector.broadcast %cst_35 : f32 to vector<16x1xf32>
    %70 = arith.addf %68, %69 : vector<16x1xf32>
    %71 = math.rsqrt %70 : vector<16x1xf32>
    %72 = vector.broadcast %71 : vector<16x1xf32> to vector<16x128xf32>
    %73 = arith.mulf %63, %72 : vector<16x128xf32>
    %74 = vector.broadcast %52 : vector<1x128xf32> to vector<16x128xf32>
    %75 = arith.mulf %73, %74 : vector<16x128xf32>
    %76 = vector.broadcast %53 : vector<1x128xf32> to vector<16x128xf32>
    %77 = arith.addf %75, %76 : vector<16x128xf32>
    %c0_36 = arith.constant 0 : index
    %c0_37 = arith.constant 0 : index
    %78 = vector.load %arg11[%c0_36, %c0_37] : memref<16x128xf32, #tpu.memory_space<vmem>>, vector<16x128xf32>
    tpu.vector_store %arg11[%c0_36, %c0_37], %77 {strides = array<i32>} : memref<16x128xf32, #tpu.memory_space<vmem>>, vector<16x128xf32>,
    return
  }
  func.func @transform_0(%arg0: i32) -> (i32, i32, i32) {
    %c0_i32 = arith.constant 0 : i32
    %c0_i32_0 = arith.constant 0 : i32
    %c0_i32_1 = arith.constant 0 : i32
    return %arg0, %c0_i32, %c0_i32_0 : i32, i32, i32
  }
  func.func @transform_1(%arg0: i32) -> (i32, i32) {
    %c0_i32 = arith.constant 0 : i32
    %c0_i32_0 = arith.constant 0 : i32
    return %arg0, %c0_i32 : i32, i32
  }
  func.func @transform_2(%arg0: i32) -> (i32, i32) {
    %c0_i32 = arith.constant 0 : i32
    %c0_i32_0 = arith.constant 0 : i32
    %c0_i32_1 = arith.constant 0 : i32
    return %c0_i32, %c0_i32_0 : i32, i32
  }
  func.func @transform_3(%arg0: i32) -> (i32, i32) {
    %c0_i32 = arith.constant 0 : i32
    %c0_i32_0 = arith.constant 0 : i32
    %c0_i32_1 = arith.constant 0 : i32
    return %c0_i32, %c0_i32_0 : i32, i32
  }
  func.func @transform_4(%arg0: i32) -> (i32, i32) {
    %c0_i32 = arith.constant 0 : i32
    %c0_i32_0 = arith.constant 0 : i32
    %c0_i32_1 = arith.constant 0 : i32
    return %c0_i32, %c0_i32_0 : i32, i32
  }
  func.func @transform_5(%arg0: i32) -> (i32, i32) {
    %c0_i32 = arith.constant 0 : i32
    %c0_i32_0 = arith.constant 0 : i32
    %c0_i32_1 = arith.constant 0 : i32
    return %c0_i32, %c0_i32_0 : i32, i32
  }
  func.func @transform_6(%arg0: i32) -> (i32, i32) {
    %c0_i32 = arith.constant 0 : i32
    %c0_i32_0 = arith.constant 0 : i32
    %c0_i32_1 = arith.constant 0 : i32
    return %c0_i32, %c0_i32_0 : i32, i32
  }
  func.func @transform_7(%arg0: i32) -> (i32, i32) {
    %c0_i32 = arith.constant 0 : i32
    %c0_i32_0 = arith.constant 0 : i32
    %c0_i32_1 = arith.constant 0 : i32
    return %c0_i32, %c0_i32_0 : i32, i32
  }
  func.func @transform_8(%arg0: i32) -> (i32, i32) {
    %c0_i32 = arith.constant 0 : i32
    %c0_i32_0 = arith.constant 0 : i32
    %c0_i32_1 = arith.constant 0 : i32
    return %c0_i32, %c0_i32_0 : i32, i32
  }
  func.func @transform_9(%arg0: i32) -> (i32, i32) {
    %c0_i32 = arith.constant 0 : i32
    %c0_i32_0 = arith.constant 0 : i32
    %c0_i32_1 = arith.constant 0 : i32
    return %c0_i32, %c0_i32_0 : i32, i32
  }
  func.func @transform_10(%arg0: i32) -> (i32, i32) {
    %c0_i32 = arith.constant 0 : i32
    %c0_i32_0 = arith.constant 0 : i32
    return %arg0, %c0_i32 : i32, i32
  }
}

</mosaic_0001>

<llo_original>
// kernel: selective_attention.1
$region0: #{selective_attention.1}
  #allocation0 [shape = 'u32[]', space=smem, size = 0x4, offset = 0x4, fixed_abs, tag = 'smem constant byte address 0x4 - core index']
  #allocation1 [shape = 'u32[144,128]{1,0:T(1,128)}', space=vmem, size = 0x12000, scoped, tag = 'internal scratch']
  %s0 = inlined_call_operand.vmem [shape: f32[2,128,128], index: 0, kind: input, shape index: {}]
  %s1 = inlined_call_operand.vmem [shape: f32[16,128], index: 1, kind: input, shape index: {}]
  %s2 = inlined_call_operand.hbm [shape: f32[128,128], index: 2, kind: input, shape index: {}]
  %s3 = inlined_call_operand.vmem [shape: f32[1,128], index: 3, kind: input, shape index: {}]
  %s4 = inlined_call_operand.vmem [shape: f32[1,128], index: 4, kind: input, shape index: {}]
  %s5 = inlined_call_operand.vmem [shape: f32[1,128], index: 5, kind: input, shape index: {}]
  %s6 = inlined_call_operand.vmem [shape: f32[128,256], index: 6, kind: input, shape index: {}]
  %s7 = inlined_call_operand.vmem [shape: f32[1,256], index: 7, kind: input, shape index: {}]
  %s8 = inlined_call_operand.vmem [shape: f32[1,128], index: 8, kind: input, shape index: {}]
  %s9 = inlined_call_operand.vmem [shape: f32[1,128], index: 9, kind: input, shape index: {}]
  %s10 = inlined_call_operand.hbm [shape: f32[16,128], index: 10, kind: output, shape index: {}]
  %s11 = sld [smem:[#allocation0]]
  $region54: #{selective_attention.1} parent=0
    _
  %s13 = ssub.s32 1, %s11
  %s14 = scalar_select 0, %s13, %s11
  $region1: #{selective_attention.1} parent=0
    #allocation2 [shape = 'u8[65536]{0}', space=vmem, size = 0x10000, scoped, tag = 'input window, operand 2, single buffered']
    #allocation3 [shape = 's32[1]{0}', space=sflag, size = 0x4, scoped, tag = 'scoped memory for selective_attention.1']
    #allocation4 [shape = 's32[1]{0}', space=sflag, size = 0x4, scoped, tag = 'scoped memory for selective_attention.1']
    #allocation5 [shape = 'u8[8192]{0}', space=vmem, size = 0x2000, scoped, tag = 'output window, operand 0, single buffered']
    %15 = vsyncpa [#allocation3], 0
    %16 = vsyncpa [#allocation4], 0
    // Predicated region
    $region2: #{selective_attention.1} parent=1 // pred_check
      _
    $region3: #{selective_attention.1} parent=1 // pred_check_branch
      %18 = sbr.rel (0) target = $region5
    $region4: #{selective_attention.1} parent=1 // pred_region
      _
    $region5: #{selective_attention.1} parent=1 // pred_fallthru
      _
    // Predicated region
    $region6: #{selective_attention.1} parent=1 // pred_check
      _
    $region7: #{selective_attention.1} parent=1 // pred_check_branch
      %20 = sbr.rel (0) target = $region9
    $region8: #{selective_attention.1} parent=1 // pred_region
      _
    $region9: #{selective_attention.1} parent=1 // pred_fallthru
      _
    // Predicated region
    $region10: #{selective_attention.1} parent=1 // pred_check
      _
    $region11: #{selective_attention.1} parent=1 // pred_check_branch
      %22 = sbr.rel (0) target = $region13
    $region12: #{selective_attention.1} parent=1 // pred_region
      %s24 = ssub.s32 2048, 2048
      %25 = vsyncadd [#allocation3], %s24
      %s26 = sshll.u32 [#allocation2], 4
      %s27 = int_to_ptr.vmem [resolvable:$true] %s26
      %32 = dma.hbm_to_vmem [thread:$0]  %s2, 2048, %s27, [#allocation3], 128, 128, 8
    $region13: #{selective_attention.1} parent=1 // pred_fallthru
      _
    // Predicated region
    $region14: #{selective_attention.1} parent=1 // pred_check
      _
    $region15: #{selective_attention.1} parent=1 // pred_check_branch
      %34 = sbr.rel (0) target = $region17
    $region16: #{selective_attention.1} parent=1 // pred_region
      _
    $region17: #{selective_attention.1} parent=1 // pred_fallthru
      _
    // Predicated region
    $region18: #{selective_attention.1} parent=1 // pred_check
      _
    $region19: #{selective_attention.1} parent=1 // pred_check_branch
      %36 = sbr.rel (0) target = $region21
    $region20: #{selective_attention.1} parent=1 // pred_region
      _
    $region21: #{selective_attention.1} parent=1 // pred_fallthru
      _
    // Predicated region
    $region22: #{selective_attention.1} parent=1 // pred_check
      _
    $region23: #{selective_attention.1} parent=1 // pred_check_branch
      %38 = sbr.rel (0) target = $region25
    $region24: #{selective_attention.1} parent=1 // pred_region
      _
    $region25: #{selective_attention.1} parent=1 // pred_fallthru
      _
    // Predicated region
    $region26: #{selective_attention.1} parent=1 // pred_check
      _
    $region27: #{selective_attention.1} parent=1 // pred_check_branch
      %40 = sbr.rel (0) target = $region29
    $region28: #{selective_attention.1} parent=1 // pred_region
      _
    $region29: #{selective_attention.1} parent=1 // pred_fallthru
      _
    // Predicated region
    $region30: #{selective_attention.1} parent=1 // pred_check
      _
    $region31: #{selective_attention.1} parent=1 // pred_check_branch
      %42 = sbr.rel (0) target = $region33
    $region32: #{selective_attention.1} parent=1 // pred_region
      _
    $region33: #{selective_attention.1} parent=1 // pred_fallthru
      _
    // Predicated region
    $region34: #{selective_attention.1} parent=1 // pred_check
      _
    $region35: #{selective_attention.1} parent=1 // pred_check_branch
      %44 = sbr.rel (0) target = $region37
    $region36: #{selective_attention.1} parent=1 // pred_region
      _
    $region37: #{selective_attention.1} parent=1 // pred_fallthru
      _
    // Predicated region
    $region38: #{selective_attention.1} parent=1 // pred_check
      _
    $region39: #{selective_attention.1} parent=1 // pred_check_branch
      %46 = sbr.rel (0) target = $region41
    $region40: #{selective_attention.1} parent=1 // pred_region
      _
    $region41: #{selective_attention.1} parent=1 // pred_fallthru
      _
    // Predicated region
    $region42: #{selective_attention.1} parent=1 // pred_check
      _
    $region43: #{selective_attention.1} parent=1 // pred_check_branch
      %48 = sbr.rel (0) target = $region45
    $region44: #{selective_attention.1} parent=1 // pred_region
      %49 = dma.done [#allocation3], 2048
    $region45: #{selective_attention.1} parent=1 // pred_fallthru
      _
    %v50 = vld [vmem:[%s1] sm:$0xff]
    %v51 = vld [vmem:[%s1 + $0x8] sm:$0xff]
    %v52 = vld [vmem:[%s0] sm:$0xff]
    %v53 = vld [vmem:[%s0 + $0x8] sm:$0xff]
    %v54 = vld [vmem:[%s0 + $0x10] sm:$0xff]
    %v55 = vld [vmem:[%s0 + $0x18] sm:$0xff]
    %v56 = vld [vmem:[%s0 + $0x20] sm:$0xff]
    %v57 = vld [vmem:[%s0 + $0x28] sm:$0xff]
    %v58 = vld [vmem:[%s0 + $0x30] sm:$0xff]
    %v59 = vld [vmem:[%s0 + $0x38] sm:$0xff]
    %v60 = vld [vmem:[%s0 + $0x40] sm:$0xff]
    %v61 = vld [vmem:[%s0 + $0x48] sm:$0xff]
    %v62 = vld [vmem:[%s0 + $0x50] sm:$0xff]
    %v63 = vld [vmem:[%s0 + $0x58] sm:$0xff]
    %v64 = vld [vmem:[%s0 + $0x60] sm:$0xff]
    %v65 = vld [vmem:[%s0 + $0x68] sm:$0xff]
    %v66 = vld [vmem:[%s0 + $0x70] sm:$0xff]
    %v67 = vld [vmem:[%s0 + $0x78] sm:$0xff]
    %v68 = vld [vmem:[%s0 + $0x80] sm:$0xff]
    %v69 = vld [vmem:[%s0 + $0x88] sm:$0xff]
    %v70 = vld [vmem:[%s0 + $0x90] sm:$0xff]
    %v71 = vld [vmem:[%s0 + $0x98] sm:$0xff]
    %v72 = vld [vmem:[%s0 + $0xa0] sm:$0xff]
    %v73 = vld [vmem:[%s0 + $0xa8] sm:$0xff]
    %v74 = vld [vmem:[%s0 + $0xb0] sm:$0xff]
    %v75 = vld [vmem:[%s0 + $0xb8] sm:$0xff]
    %v76 = vld [vmem:[%s0 + $0xc0] sm:$0xff]
    %v77 = vld [vmem:[%s0 + $0xc8] sm:$0xff]
    %v78 = vld [vmem:[%s0 + $0xd0] sm:$0xff]
    %v79 = vld [vmem:[%s0 + $0xd8] sm:$0xff]
    %v80 = vld [vmem:[%s0 + $0xe0] sm:$0xff]
    %v81 = vld [vmem:[%s0 + $0xe8] sm:$0xff]
    %v82 = vld [vmem:[%s0 + $0xf0] sm:$0xff]
    %v83 = vld [vmem:[%s0 + $0xf8] sm:$0xff]
    %v84 = vlaneseq
    %v85 = vand.u32 %v84, 127
    %vm86 = vcmp.lt.s32.totalorder %v85, 32
    %v87 = vld [vmem:[#allocation2] sm:$0xff]
    %v88 = vld [vmem:[#allocation2 + $0x8] sm:$0xff]
    %v89 = vld [vmem:[#allocation2 + $0x10] sm:$0xff]
    %v90 = vld [vmem:[#allocation2 + $0x18] sm:$0xff]
    %v91 = vld [vmem:[#allocation2 + $0x20] sm:$0xff]
    %v92 = vld [vmem:[#allocation2 + $0x28] sm:$0xff]
    %v93 = vld [vmem:[#allocation2 + $0x30] sm:$0xff]
    %v94 = vld [vmem:[#allocation2 + $0x38] sm:$0xff]
    %v95 = vld [vmem:[#allocation2 + $0x40] sm:$0xff]
    %v96 = vld [vmem:[#allocation2 + $0x48] sm:$0xff]
    %v97 = vld [vmem:[#allocation2 + $0x50] sm:$0xff]
    %v98 = vld [vmem:[#allocation2 + $0x58] sm:$0xff]
    %v99 = vld [vmem:[#allocation2 + $0x60] sm:$0xff]
    %v100 = vld [vmem:[#allocation2 + $0x68] sm:$0xff]
    %v101 = vld [vmem:[#allocation2 + $0x70] sm:$0xff]
    %v102 = vld [vmem:[#allocation2 + $0x78] sm:$0xff]
    %v103 = vld [vmem:[%s3] sm:$0x1]
    %v105 = vlaneseq
    %v106 = vshrl.u32 %v105, 7
    %v107 = vsub.s32 0, %v106
    %v108 = vrot.slane %v103, %v107
    %110 = vmatprep.subr.mxu0 0.0
    %111 = vmatpush1.msra.mxu0 %v87
    %112 = vmatprep.subr.mxu0 0.0
    %113 = vmatpush1.msra.mxu0 %v88
    %114 = vmatprep.subr.mxu0 0.0
    %115 = vmatpush1.msra.mxu0 %v89
    %116 = vmatprep.subr.mxu0 0.0
    %117 = vmatpush1.msra.mxu0 %v90
    %118 = vmatprep.subr.mxu0 0.0
    %119 = vmatpush1.msra.mxu0 %v91
    %120 = vmatprep.subr.mxu0 0.0
    %121 = vmatpush1.msra.mxu0 %v92
    %122 = vmatprep.subr.mxu0 0.0
    %123 = vmatpush1.msra.mxu0 %v93
    %124 = vmatprep.subr.mxu0 0.0
    %125 = vmatpush1.msra.mxu0 %v94
    %126 = vmatprep.subr.mxu0 0.0
    %127 = vmatpush1.msra.mxu0 %v95
    %128 = vmatprep.subr.mxu0 0.0
    %129 = vmatpush1.msra.mxu0 %v96
    %130 = vmatprep.subr.mxu0 0.0
    %131 = vmatpush1.msra.mxu0 %v97
    %132 = vmatprep.subr.mxu0 0.0
    %133 = vmatpush1.msra.mxu0 %v98
    %134 = vmatprep.subr.mxu0 0.0
    %135 = vmatpush1.msra.mxu0 %v99
    %136 = vmatprep.subr.mxu0 0.0
    %137 = vmatpush1.msra.mxu0 %v100
    %138 = vmatprep.subr.mxu0 0.0
    %139 = vmatpush1.msra.mxu0 %v101
    %140 = vmatprep.subr.mxu0 0.0
    %141 = vmatpush1.msra.mxu0 %v102
    %142 = vmatprep.subr.mxu0 0.0
    %143 = vmatpush1.msra.mxu0 0.0
    %144 = vmatprep.subr.mxu0 0.0
    %145 = vmatpush1.msra.mxu0 0.0
    %146 = vmatprep.subr.mxu0 0.0
    %147 = vmatpush1.msra.mxu0 0.0
    %148 = vmatprep.subr.mxu0 0.0
    %149 = vmatpush1.msra.mxu0 0.0
    %150 = vmatprep.subr.mxu0 0.0
    %151 = vmatpush1.msra.mxu0 0.0
    %152 = vmatprep.subr.mxu0 0.0
    %153 = vmatpush1.msra.mxu0 0.0
    %154 = vmatprep.subr.mxu0 0.0
    %155 = vmatpush1.msra.mxu0 0.0
    %156 = vmatprep.subr.mxu0 0.0
    %157 = vmatpush1.msra.mxu0 0.0
    %158 = vmatprep.subr.mxu0 0.0
    %159 = vmatpush1.msra.mxu0 0.0
    %160 = vmatprep.subr.mxu0 0.0
    %161 = vmatpush1.msra.mxu0 0.0
    %162 = vmatprep.subr.mxu0 0.0
    %163 = vmatpush1.msra.mxu0 0.0
    %164 = vmatprep.subr.mxu0 0.0
    %165 = vmatpush1.msra.mxu0 0.0
    %166 = vmatprep.subr.mxu0 0.0
    %167 = vmatpush1.msra.mxu0 0.0
    %168 = vmatprep.subr.mxu0 0.0
    %169 = vmatpush1.msra.mxu0 0.0
    %170 = vmatprep.subr.mxu0 0.0
    %171 = vmatpush1.msra.mxu0 0.0
    %172 = vmatprep.subr.mxu0 0.0
    %173 = vmatpush1.msra.mxu0 0.0
    %174 = vmatprep.mubr.f32.mxu0 0.0
    %175 = vmatmul.mubr.f32.gmra.mrb[0].mxu0 %v50
    %v176 = vpop.f32.mrb[0].mxu0
    %v177 = vadd.f32 %v108, %v176
    %v178 = vpop.f32.mrb[0].mxu0
    %179 = vmatprep.mubr.f32.mxu0 0.0
    %180 = vmatmul.mubr.f32.gmra.mrb[0].mxu0 %v51
    %v181 = vpop.f32.mrb[0].mxu0
    %v182 = vadd.f32 %v108, %v181
    %v183 = vpop.f32.mrb[0].mxu0
    %184 = vdwg.mxu0
    %185 = vmatprep.subr.mxu0 0.0
    %186 = vmatpush1.msra.mxu0 %v52
    %187 = vmatprep.subr.mxu0 0.0
    %188 = vmatpush1.msra.mxu0 %v53
    %189 = vmatprep.subr.mxu0 0.0
    %190 = vmatpush1.msra.mxu0 %v54
    %191 = vmatprep.subr.mxu0 0.0
    %192 = vmatpush1.msra.mxu0 %v55
    %193 = vmatprep.subr.mxu0 0.0
    %194 = vmatpush1.msra.mxu0 %v56
    %195 = vmatprep.subr.mxu0 0.0
    %196 = vmatpush1.msra.mxu0 %v57
    %197 = vmatprep.subr.mxu0 0.0
    %198 = vmatpush1.msra.mxu0 %v58
    %199 = vmatprep.subr.mxu0 0.0
    %200 = vmatpush1.msra.mxu0 %v59
    %201 = vmatprep.subr.mxu0 0.0
    %202 = vmatpush1.msra.mxu0 %v60
    %203 = vmatprep.subr.mxu0 0.0
    %204 = vmatpush1.msra.mxu0 %v61
    %205 = vmatprep.subr.mxu0 0.0
    %206 = vmatpush1.msra.mxu0 %v62
    %207 = vmatprep.subr.mxu0 0.0
    %208 = vmatpush1.msra.mxu0 %v63
    %209 = vmatprep.subr.mxu0 0.0
    %210 = vmatpush1.msra.mxu0 %v64
    %211 = vmatprep.subr.mxu0 0.0
    %212 = vmatpush1.msra.mxu0 %v65
    %213 = vmatprep.subr.mxu0 0.0
    %214 = vmatpush1.msra.mxu0 %v66
    %215 = vmatprep.subr.mxu0 0.0
    %216 = vmatpush1.msra.mxu0 %v67
    %217 = vmatprep.subr.mxu0 0.0
    %218 = vmatpush1.msra.mxu0 0.0
    %219 = vmatprep.subr.mxu0 0.0
    %220 = vmatpush1.msra.mxu0 0.0
    %221 = vmatprep.subr.mxu0 0.0
    %222 = vmatpush1.msra.mxu0 0.0
    %223 = vmatprep.subr.mxu0 0.0
    %224 = vmatpush1.msra.mxu0 0.0
    %225 = vmatprep.subr.mxu0 0.0
    %226 = vmatpush1.msra.mxu0 0.0
    %227 = vmatprep.subr.mxu0 0.0
    %228 = vmatpush1.msra.mxu0 0.0
    %229 = vmatprep.subr.mxu0 0.0
    %230 = vmatpush1.msra.mxu0 0.0
    %231 = vmatprep.subr.mxu0 0.0
    %232 = vmatpush1.msra.mxu0 0.0
    %233 = vmatprep.subr.mxu0 0.0
    %234 = vmatpush1.msra.mxu0 0.0
    %235 = vmatprep.subr.mxu0 0.0
    %236 = vmatpush1.msra.mxu0 0.0
    %237 = vmatprep.subr.mxu0 0.0
    %238 = vmatpush1.msra.mxu0 0.0
    %239 = vmatprep.subr.mxu0 0.0
    %240 = vmatpush1.msra.mxu0 0.0
    %241 = vmatprep.subr.mxu0 0.0
    %242 = vmatpush1.msra.mxu0 0.0
    %243 = vmatprep.subr.mxu0 0.0
    %244 = vmatpush1.msra.mxu0 0.0
    %245 = vmatprep.subr.mxu0 0.0
    %246 = vmatpush1.msra.mxu0 0.0
    %247 = vmatprep.subr.mxu0 0.0
    %248 = vmatpush1.msra.mxu0 0.0
    %249 = vmatprep.mubr.f32.mxu0 0.0
    %250 = vmatmul.mubr.f32.gmra.mrb[0].mxu0 %v177
    %v251 = vpop.f32.mrb[0].mxu0
    %v252 = vadd.f32 0.0, %v251
    %v253 = vpop.f32.mrb[0].mxu0
    %254 = vdwg.mxu0
    %255 = vmatprep.subr.mxu0 0.0
    %256 = vmatpush1.msra.mxu0 %v68
    %257 = vmatprep.subr.mxu0 0.0
    %258 = vmatpush1.msra.mxu0 %v69
    %259 = vmatprep.subr.mxu0 0.0
    %260 = vmatpush1.msra.mxu0 %v70
    %261 = vmatprep.subr.mxu0 0.0
    %262 = vmatpush1.msra.mxu0 %v71
    %263 = vmatprep.subr.mxu0 0.0
    %264 = vmatpush1.msra.mxu0 %v72
    %265 = vmatprep.subr.mxu0 0.0
    %266 = vmatpush1.msra.mxu0 %v73
    %267 = vmatprep.subr.mxu0 0.0
    %268 = vmatpush1.msra.mxu0 %v74
    %269 = vmatprep.subr.mxu0 0.0
    %270 = vmatpush1.msra.mxu0 %v75
    %271 = vmatprep.subr.mxu0 0.0
    %272 = vmatpush1.msra.mxu0 %v76
    %273 = vmatprep.subr.mxu0 0.0
    %274 = vmatpush1.msra.mxu0 %v77
    %275 = vmatprep.subr.mxu0 0.0
    %276 = vmatpush1.msra.mxu0 %v78
    %277 = vmatprep.subr.mxu0 0.0
    %278 = vmatpush1.msra.mxu0 %v79
    %279 = vmatprep.subr.mxu0 0.0
    %280 = vmatpush1.msra.mxu0 %v80
    %281 = vmatprep.subr.mxu0 0.0
    %282 = vmatpush1.msra.mxu0 %v81
    %283 = vmatprep.subr.mxu0 0.0
    %284 = vmatpush1.msra.mxu0 %v82
    %285 = vmatprep.subr.mxu0 0.0
    %286 = vmatpush1.msra.mxu0 %v83
    %287 = vmatprep.subr.mxu0 0.0
    %288 = vmatpush1.msra.mxu0 0.0
    %289 = vmatprep.subr.mxu0 0.0
    %290 = vmatpush1.msra.mxu0 0.0
    %291 = vmatprep.subr.mxu0 0.0
    %292 = vmatpush1.msra.mxu0 0.0
    %293 = vmatprep.subr.mxu0 0.0
    %294 = vmatpush1.msra.mxu0 0.0
    %295 = vmatprep.subr.mxu0 0.0
    %296 = vmatpush1.msra.mxu0 0.0
    %297 = vmatprep.subr.mxu0 0.0
    %298 = vmatpush1.msra.mxu0 0.0
    %299 = vmatprep.subr.mxu0 0.0
    %300 = vmatpush1.msra.mxu0 0.0
    %301 = vmatprep.subr.mxu0 0.0
    %302 = vmatpush1.msra.mxu0 0.0
    %303 = vmatprep.subr.mxu0 0.0
    %304 = vmatpush1.msra.mxu0 0.0
    %305 = vmatprep.subr.mxu0 0.0
    %306 = vmatpush1.msra.mxu0 0.0
    %307 = vmatprep.subr.mxu0 0.0
    %308 = vmatpush1.msra.mxu0 0.0
    %309 = vmatprep.subr.mxu0 0.0
    %310 = vmatpush1.msra.mxu0 0.0
    %311 = vmatprep.subr.mxu0 0.0
    %312 = vmatpush1.msra.mxu0 0.0
    %313 = vmatprep.subr.mxu0 0.0
    %314 = vmatpush1.msra.mxu0 0.0
    %315 = vmatprep.subr.mxu0 0.0
    %316 = vmatpush1.msra.mxu0 0.0
    %317 = vmatprep.subr.mxu0 0.0
    %318 = vmatpush1.msra.mxu0 0.0
    %319 = vmatprep.mubr.f32.mxu0 0.0
    %320 = vmatmul.mubr.f32.gmra.mrb[0].mxu0 %v182
    %v321 = vpop.f32.mrb[0].mxu0
    %v322 = vadd.f32 0.0, %v321
    %v323 = vpop.f32.mrb[0].mxu0
    %324 = vdwg.mxu0
    %v325 = vld [vmem:[%s4] sm:$0x1]
    %v326 = vld [vmem:[%s5] sm:$0x1]
    %327 = vadd.xlane.f32.xlu0 %v252
    %v328 = vpop.xlane.xlu0 %327
    %329 = vadd.xlane.f32.xlu0 %v322
    %v330 = vpop.xlane.xlu0 %329
    %v331 = vmul.f32 %v328, 0.03125
    %v332 = vmul.f32 %v330, 0.03125
    %v333 = vsub.f32 %v252, %v331
    %v334 = vsub.f32 %v322, %v332
    %v335 = vsel %vm86, 1, 0
    %vm336 = vcmp.eq.s32.totalorder %v335, 1
    %v337 = vsel %vm336, %v333, 0.0
    %v338 = vsel %vm336, %v334, 0.0
    %v339 = vmul.f32 %v337, %v337
    %v340 = vmul.f32 %v338, %v338
    %341 = vadd.xlane.f32.xlu0 %v339
    %v342 = vpop.xlane.xlu0 %341
    %343 = vadd.xlane.f32.xlu0 %v340
    %v344 = vpop.xlane.xlu0 %343
    %v345 = vmul.f32 %v342, 0.03125
    %v346 = vmul.f32 %v344, 0.03125
    %v347 = vadd.f32 %v345, 1e-05
    %v348 = vadd.f32 %v346, 1e-05
    %v349 = vrsqrt.pop %v347
    %v350 = vrsqrt.pop %v348
    %v351 = vmul.f32 %v337, %v349
    %v352 = vmul.f32 %v338, %v350
    %v354 = vlaneseq
    %v355 = vshrl.u32 %v354, 7
    %v356 = vsub.s32 0, %v355
    %v357 = vrot.slane %v325, %v356
    %v359 = vmul.f32 %v351, %v357
    %v360 = vmul.f32 %v352, %v357
    %v362 = vlaneseq
    %v363 = vshrl.u32 %v362, 7
    %v364 = vsub.s32 0, %v363
    %v365 = vrot.slane %v326, %v364
    %v367 = vadd.f32 %v359, %v365
    %v368 = vadd.f32 %v360, %v365
    %v369 = vld [vmem:[%s6] sm:$0xff]
    %v370 = vld [vmem:[%s6 + $0x8] sm:$0xff]
    %v371 = vld [vmem:[%s6 + $0x10] sm:$0xff]
    %v372 = vld [vmem:[%s6 + $0x18] sm:$0xff]
    %v373 = vld [vmem:[%s6 + $0x20] sm:$0xff]
    %v374 = vld [vmem:[%s6 + $0x28] sm:$0xff]
    %v375 = vld [vmem:[%s6 + $0x30] sm:$0xff]
    %v376 = vld [vmem:[%s6 + $0x38] sm:$0xff]
    %v377 = vld [vmem:[%s6 + $0x40] sm:$0xff]
    %v378 = vld [vmem:[%s6 + $0x48] sm:$0xff]
    %v379 = vld [vmem:[%s6 + $0x50] sm:$0xff]
    %v380 = vld [vmem:[%s6 + $0x58] sm:$0xff]
    %v381 = vld [vmem:[%s6 + $0x60] sm:$0xff]
    %v382 = vld [vmem:[%s6 + $0x68] sm:$0xff]
    %v383 = vld [vmem:[%s6 + $0x70] sm:$0xff]
    %v384 = vld [vmem:[%s6 + $0x78] sm:$0xff]
    %v385 = vld [vmem:[%s6 + $0x80] sm:$0xff]
    %v386 = vld [vmem:[%s6 + $0x88] sm:$0xff]
    %v387 = vld [vmem:[%s6 + $0x90] sm:$0xff]
    %v388 = vld [vmem:[%s6 + $0x98] sm:$0xff]
    %v389 = vld [vmem:[%s6 + $0xa0] sm:$0xff]
    %v390 = vld [vmem:[%s6 + $0xa8] sm:$0xff]
    %v391 = vld [vmem:[%s6 + $0xb0] sm:$0xff]
    %v392 = vld [vmem:[%s6 + $0xb8] sm:$0xff]
    %v393 = vld [vmem:[%s6 + $0xc0] sm:$0xff]
    %v394 = vld [vmem:[%s6 + $0xc8] sm:$0xff]
    %v395 = vld [vmem:[%s6 + $0xd0] sm:$0xff]
    %v396 = vld [vmem:[%s6 + $0xd8] sm:$0xff]
    %v397 = vld [vmem:[%s6 + $0xe0] sm:$0xff]
    %v398 = vld [vmem:[%s6 + $0xe8] sm:$0xff]
    %v399 = vld [vmem:[%s6 + $0xf0] sm:$0xff]
    %v400 = vld [vmem:[%s6 + $0xf8] sm:$0xff]
    %v401 = vld [vmem:[%s7] sm:$0x3]
    %v403 = vlaneseq
    %v404 = vshrl.u32 %v403, 7
    %v405 = vsub.s32 0, %v404
    %v406 = vrot.slane %v401, %v405
    %v407 = vlaneseq
    %v408 = vshrl.u32 %v407, 7
    %v409 = vsub.s32 1, %v408
    %v410 = vrot.slane %v401, %v409
    %413 = vmatprep.subr.mxu0 %v370
    %414 = vmatpush1.msra.mxu0 %v369
    %415 = vmatprep.subr.mxu0 %v372
    %416 = vmatpush1.msra.mxu0 %v371
    %417 = vmatprep.subr.mxu0 %v374
    %418 = vmatpush1.msra.mxu0 %v373
    %419 = vmatprep.subr.mxu0 %v376
    %420 = vmatpush1.msra.mxu0 %v375
    %421 = vmatprep.subr.mxu0 %v378
    %422 = vmatpush1.msra.mxu0 %v377
    %423 = vmatprep.subr.mxu0 %v380
    %424 = vmatpush1.msra.mxu0 %v379
    %425 = vmatprep.subr.mxu0 %v382
    %426 = vmatpush1.msra.mxu0 %v381
    %427 = vmatprep.subr.mxu0 %v384
    %428 = vmatpush1.msra.mxu0 %v383
    %429 = vmatprep.subr.mxu0 %v386
    %430 = vmatpush1.msra.mxu0 %v385
    %431 = vmatprep.subr.mxu0 %v388
    %432 = vmatpush1.msra.mxu0 %v387
    %433 = vmatprep.subr.mxu0 %v390
    %434 = vmatpush1.msra.mxu0 %v389
    %435 = vmatprep.subr.mxu0 %v392
    %436 = vmatpush1.msra.mxu0 %v391
    %437 = vmatprep.subr.mxu0 %v394
    %438 = vmatpush1.msra.mxu0 %v393
    %439 = vmatprep.subr.mxu0 %v396
    %440 = vmatpush1.msra.mxu0 %v395
    %441 = vmatprep.subr.mxu0 %v398
    %442 = vmatpush1.msra.mxu0 %v397
    %443 = vmatprep.subr.mxu0 %v400
    %444 = vmatpush1.msra.mxu0 %v399
    %445 = vmatprep.subr.mxu0 0.0
    %446 = vmatpush1.msra.mxu0 0.0
    %447 = vmatprep.subr.mxu0 0.0
    %448 = vmatpush1.msra.mxu0 0.0
    %449 = vmatprep.subr.mxu0 0.0
    %450 = vmatpush1.msra.mxu0 0.0
    %451 = vmatprep.subr.mxu0 0.0
    %452 = vmatpush1.msra.mxu0 0.0
    %453 = vmatprep.subr.mxu0 0.0
    %454 = vmatpush1.msra.mxu0 0.0
    %455 = vmatprep.subr.mxu0 0.0
    %456 = vmatpush1.msra.mxu0 0.0
    %457 = vmatprep.subr.mxu0 0.0
    %458 = vmatpush1.msra.mxu0 0.0
    %459 = vmatprep.subr.mxu0 0.0
    %460 = vmatpush1.msra.mxu0 0.0
    %461 = vmatprep.subr.mxu0 0.0
    %462 = vmatpush1.msra.mxu0 0.0
    %463 = vmatprep.subr.mxu0 0.0
    %464 = vmatpush1.msra.mxu0 0.0
    %465 = vmatprep.subr.mxu0 0.0
    %466 = vmatpush1.msra.mxu0 0.0
    %467 = vmatprep.subr.mxu0 0.0
    %468 = vmatpush1.msra.mxu0 0.0
    %469 = vmatprep.subr.mxu0 0.0
    %470 = vmatpush1.msra.mxu0 0.0
    %471 = vmatprep.subr.mxu0 0.0
    %472 = vmatpush1.msra.mxu0 0.0
    %473 = vmatprep.subr.mxu0 0.0
    %474 = vmatpush1.msra.mxu0 0.0
    %475 = vmatprep.subr.mxu0 0.0
    %476 = vmatpush1.msra.mxu0 0.0
    %477 = vmatprep.mubr.f32.mxu0 0.0
    %478 = vmatmul.mubr.f32.gmra.mrb[0].mxu0 %v367
    %v479 = vpop.f32.mrb[0].mxu0
    %v480 = vadd.f32 %v406, %v479
    %v481 = vpop.f32.mrb[0].mxu0
    %v482 = vadd.f32 %v410, %v481
    %483 = vmatprep.mubr.f32.mxu0 0.0
    %484 = vmatmul.mubr.f32.gmra.mrb[0].mxu0 %v368
    %v485 = vpop.f32.mrb[0].mxu0
    %v486 = vadd.f32 %v406, %v485
    %v487 = vpop.f32.mrb[0].mxu0
    %v488 = vadd.f32 %v410, %v487
    %489 = vdwg.mxu0
    %v490 = vmax.f32 %v480, 0.0
    %v491 = vmax.f32 %v482, 0.0
    %v492 = vmax.f32 %v486, 0.0
    %v493 = vmax.f32 %v488, 0.0
    %v494 = vmul.f32 %v490, %v491
    %v495 = vmul.f32 %v492, %v493
    %v496 = vld [vmem:[%s8] sm:$0x1]
    %v497 = vld [vmem:[%s9] sm:$0x1]
    %498 = vadd.xlane.f32.xlu0 %v494
    %v499 = vpop.xlane.xlu0 %498
    %500 = vadd.xlane.f32.xlu0 %v495
    %v501 = vpop.xlane.xlu0 %500
    %v502 = vmul.f32 %v499, 0.03125
    %v503 = vmul.f32 %v501, 0.03125
    %v504 = vsub.f32 %v494, %v502
    %v505 = vsub.f32 %v495, %v503
    %v506 = vsel %vm336, %v504, 0.0
    %v507 = vsel %vm336, %v505, 0.0
    %v508 = vmul.f32 %v506, %v506
    %v509 = vmul.f32 %v507, %v507
    %510 = vadd.xlane.f32.xlu0 %v508
    %v511 = vpop.xlane.xlu0 %510
    %512 = vadd.xlane.f32.xlu0 %v509
    %v513 = vpop.xlane.xlu0 %512
    %v514 = vmul.f32 %v511, 0.03125
    %v515 = vmul.f32 %v513, 0.03125
    %v516 = vadd.f32 %v514, 1e-05
    %v517 = vadd.f32 %v515, 1e-05
    %v518 = vrsqrt.pop %v516
    %v519 = vrsqrt.pop %v517
    %v520 = vmul.f32 %v506, %v518
    %v521 = vmul.f32 %v507, %v519
    %v523 = vlaneseq
    %v524 = vshrl.u32 %v523, 7
    %v525 = vsub.s32 0, %v524
    %v526 = vrot.slane %v496, %v525
    %v528 = vmul.f32 %v520, %v526
    %v529 = vmul.f32 %v521, %v526
    %v531 = vlaneseq
    %v532 = vshrl.u32 %v531, 7
    %v533 = vsub.s32 0, %v532
    %v534 = vrot.slane %v497, %v533
    %v536 = vadd.f32 %v528, %v534
    %v537 = vadd.f32 %v529, %v534
    %538 = vst [vmem:[#allocation5] sm:$0xff] %v536
    %539 = vst [vmem:[#allocation5 + $0x8] sm:$0xff] %v537
    // Predicated region
    $region46: #{selective_attention.1} parent=1 // pred_check
      _
    $region47: #{selective_attention.1} parent=1 // pred_check_branch
      %541 = sbr.rel (0) target = $region49
    $region48: #{selective_attention.1} parent=1 // pred_region
      %s543 = ssub.s32 256, 256
      %544 = vsyncadd [#allocation4], %s543
      %s545 = sshll.u32 [#allocation5], 4
      %s546 = int_to_ptr.vmem [resolvable:$true] %s545
      %551 = dma.vmem_to_hbm [thread:$0]  %s546, 256, %s10, [#allocation4], 128, 128, 8
    $region49: #{selective_attention.1} parent=1 // pred_fallthru
      _
    // Predicated region
    $region50: #{selective_attention.1} parent=1 // pred_check
      _
    $region51: #{selective_attention.1} parent=1 // pred_check_branch
      %553 = sbr.rel (0) target = $region53
    $region52: #{selective_attention.1} parent=1 // pred_region
      %554 = dma.done [#allocation4], 256
    $region53: #{selective_attention.1} parent=1 // pred_fallthru
      _
    %555 = vsyncpa [#allocation3], 1
    %556 = vsyncpa [#allocation4], 1

</llo_original>
